<compile_context>
chip_gen: v7x
topology: tpu7x:2x2x1
jax: 0.10.0
libtpu: 0.0.40
codegen_flags: <defaults>
</compile_context>

<pallas_src>
import jax
import jax.numpy as jnp
from jax.experimental import pallas as pl
from jax.experimental.pallas import tpu as pltpu

LN_EPS = 1e-5  # nn.LayerNorm default


def _round_up(x, m):
    return ((x + m - 1) // m) * m


def _ln_onepass(x, gamma, beta):
    # One pass over lanes: sum + sum-of-squares (halves the XLU reductions).
    inv_n = 1.0 / x.shape[-1]
    s = jnp.sum(x, axis=-1, keepdims=True)
    ss = jnp.sum(x * x, axis=-1, keepdims=True)
    mu = s * inv_n
    var = jnp.maximum(ss * inv_n - mu * mu, 0.0)
    return (x - mu) * jax.lax.rsqrt(var + LN_EPS) * gamma + beta


# --------- Kernel 1: MLP (pre-GRU part) + fused GRU input projection ---------
def mlp_proj_kernel(x_ref, fng_ref, fnb_ref,
                    w1_ref, b1_ref, g1_ref, be1_ref,
                    w2_ref, b2_ref, g2_ref, be2_ref,
                    wi_ref, bi_ref,
                    xp_ref):
    x = _ln_onepass(x_ref[...], fng_ref[...], fnb_ref[...])          # feature_norm
    h = jnp.dot(x, w1_ref[...], preferred_element_type=jnp.float32) + b1_ref[...]
    h = jnp.maximum(h, 0.0)
    h = _ln_onepass(h, g1_ref[...], be1_ref[...])                    # fc1 LN
    h = jnp.dot(h, w2_ref[...], preferred_element_type=jnp.float32) + b2_ref[...]
    h = jnp.maximum(h, 0.0)
    h = _ln_onepass(h, g2_ref[...], be2_ref[...])                    # fc_h LN
    # Fused GRU input projection for r|z|n gates (input + combined biases).
    xp_ref[...] = (jnp.dot(h, wi_ref[...], preferred_element_type=jnp.float32)
                   + bi_ref[...])


def run_mlp_proj(x2d, p, row_tile=256):
    N, D = x2d.shape
    H = p["w1"].shape[1]
    H3 = p["w_i"].shape[1]
    tile = min(row_tile, _round_up(N, 8))
    Np = _round_up(N, tile)
    if Np != N:
        x2d = jnp.pad(x2d, ((0, Np - N), (0, 0)))
    cst = lambda i: (0, 0)
    row = lambda i: (i, 0)
    out = pl.pallas_call(
        mlp_proj_kernel,
        grid=(Np // tile,),
        in_specs=[
            pl.BlockSpec((tile, D), row),
            pl.BlockSpec((1, D), cst), pl.BlockSpec((1, D), cst),
            pl.BlockSpec((D, H), cst), pl.BlockSpec((1, H), cst),
            pl.BlockSpec((1, H), cst), pl.BlockSpec((1, H), cst),
            pl.BlockSpec((H, H), cst), pl.BlockSpec((1, H), cst),
            pl.BlockSpec((1, H), cst), pl.BlockSpec((1, H), cst),
            pl.BlockSpec((H, H3), cst), pl.BlockSpec((1, H3), cst),
        ],
        out_specs=pl.BlockSpec((tile, H3), row),
        out_shape=jax.ShapeDtypeStruct((Np, H3), jnp.float32),
        compiler_params=pltpu.CompilerParams(
            dimension_semantics=("parallel",)),
    )(x2d, p["fn_g"], p["fn_b"],
      p["w1"], p["b1"], p["ln1_g"], p["ln1_b"],
      p["w2"], p["b2"], p["ln2_g"], p["ln2_b"],
      p["w_i"], p["b_i3"])
    return out[:N]


# --------------- Kernel 2: recurrent GRU (in-kernel time loop) ---------------
def gru_kernel(xp_ref, h0_ref, wh_ref, bhn_ref, raw_ref):
    T = xp_ref.shape[0]
    Bp, H = h0_ref.shape
    wh = wh_ref[...]                                    # (H, 3H), fused hidden weights
    bhn = jnp.broadcast_to(bhn_ref[...], (Bp, H))       # hoisted broadcast (no per-step CSE issue)

    def step(t, h):
        xp = xp_ref[t]                                  # (Bp, 3H); input proj + biases pre-folded
        hp = jnp.dot(h, wh, preferred_element_type=jnp.float32)      # one MXU call per step
        r = jax.nn.sigmoid(xp[:, 0 * H:1 * H] + hp[:, 0 * H:1 * H])
        z = jax.nn.sigmoid(xp[:, 1 * H:2 * H] + hp[:, 1 * H:2 * H])
        n = jnp.tanh(xp[:, 2 * H:3 * H] + r * (hp[:, 2 * H:3 * H] + bhn))
        h_new = (1.0 - z) * n + z * h
        raw_ref[pl.ds(t, 1)] = h_new[None]              # raw GRU state for step t
        return h_new

    jax.lax.fori_loop(0, T, step, h0_ref[...], unroll=(T <= 32))


def run_gru(xp, h0, p):
    T, Bp, _ = xp.shape
    H = h0.shape[1]
    return pl.pallas_call(
        gru_kernel,
        out_shape=jax.ShapeDtypeStruct((T, Bp, H), jnp.float32),
    )(xp, h0, p["w_h"], p["b_hn"])


# ------------- Kernel 3: output LayerNorm + ACT linear (batched) -------------
def ln_act_kernel(y_ref, g_ref, b_ref, wact_ref, bact_ref, out_ref):
    y = _ln_onepass(y_ref[...], g_ref[...], b_ref[...])
    out_ref[...] = (jnp.dot(y, wact_ref[...], preferred_element_type=jnp.float32)
                    + bact_ref[...])


def run_ln_act(y2d, p, row_tile=256):
    N, H = y2d.shape
    Ap = p["w_act_pad"].shape[1]
    tile = min(row_tile, _round_up(N, 8))
    Np = _round_up(N, tile)
    if Np != N:
        y2d = jnp.pad(y2d, ((0, Np - N), (0, 0)))
    cst = lambda i: (0, 0)
    row = lambda i: (i, 0)
    out = pl.pallas_call(
        ln_act_kernel,
        grid=(Np // tile,),
        in_specs=[
            pl.BlockSpec((tile, H), row),
            pl.BlockSpec((1, H), cst), pl.BlockSpec((1, H), cst),
            pl.BlockSpec((H, Ap), cst), pl.BlockSpec((1, Ap), cst),
        ],
        out_specs=pl.BlockSpec((tile, Ap), row),
        out_shape=jax.ShapeDtypeStruct((Np, Ap), jnp.float32),
        compiler_params=pltpu.CompilerParams(
            dimension_semantics=("parallel",)),
    )(y2d, p["gru_ln_g"], p["gru_ln_b"], p["w_act_pad"], p["b_act_pad"])
    return out[:N]


# ------------------------------ module wrapper -------------------------------
def r_maddpg_actor_forward(params, obs, prev_acts, rnn_states,
                           take_prev_act=False):
    obs = jnp.asarray(obs, jnp.float32)
    rnn_states = jnp.asarray(rnn_states, jnp.float32)
    if prev_acts is not None:
        prev_acts = jnp.asarray(prev_acts, jnp.float32)

    no_sequence = False
    if obs.ndim == 2:
        no_sequence = True
        obs = obs[None]
        if take_prev_act:
            prev_acts = prev_acts[None]
    if rnn_states.ndim == 2:
        rnn_states = rnn_states[None]

    inp = jnp.concatenate([obs, prev_acts], axis=-1) if take_prev_act else obs
    T, B, D = inp.shape
    H = params["w1"].shape[1]
    A = params["w_act"].shape[1]

    # (1) Batched MLP + fused GRU input projection over all T*B rows.
    xp = run_mlp_proj(inp.reshape(T * B, D), params).reshape(T, B, 3 * H)

    # (2) Pad batch to a sublane multiple for the recurrent kernel.
    Bp = _round_up(B, 8)
    if Bp != B:
        xp = jnp.pad(xp, ((0, 0), (0, Bp - B), (0, 0)))
        h0 = jnp.pad(rnn_states[0], ((0, Bp - B), (0, 0)))
    else:
        h0 = rnn_states[0]

    raw = run_gru(xp, h0, params)                 # (T, Bp, H) raw GRU states
    h_final = raw[T - 1:T, :B, :]                 # (1, B, H) raw last GRU state

    # (3) Batched output LayerNorm + ACT linear (lane-padded store).
    logits = run_ln_act(raw.reshape(T * Bp, H), params)
    act_outs = logits.reshape(T, Bp, -1)[:, :B, :A]
    if no_sequence:
        act_outs = act_outs[0]
    return act_outs, h_final


# ---------------------- deterministic parameter init -------------------------
def init_params(key, obs_dim, act_dim, hidden):
    ks = list(jax.random.split(key, 16))

    def w(k, shape, scale=0.1):
        return (scale * jax.random.normal(k, shape)).astype(jnp.float32)

    zeros = lambda s: jnp.zeros(s, jnp.float32)
    ones = lambda s: jnp.ones(s, jnp.float32)

    # TODO(synk): orthogonal/xavier init replaced by deterministic scaled normal.
    return dict(
        # feature_norm (LayerNorm over obs_dim)
        fn_g=ones((1, obs_dim)), fn_b=zeros((1, obs_dim)),
        # MLP fc1 + fc_h (layer_N = 1), weights pre-transposed (in, out)
        w1=w(ks[0], (obs_dim, hidden)), b1=zeros((1, hidden)),
        ln1_g=ones((1, hidden)), ln1_b=zeros((1, hidden)),
        w2=w(ks[1], (hidden, hidden)), b2=zeros((1, hidden)),
        ln2_g=ones((1, hidden)), ln2_b=zeros((1, hidden)),
        # GRU (per-gate; b_r = b_ir + b_hr, b_z = b_iz + b_hz pre-combined)
        w_ir=w(ks[2], (hidden, hidden)), w_iz=w(ks[3], (hidden, hidden)),
        w_in=w(ks[4], (hidden, hidden)),
        w_hr=w(ks[5], (hidden, hidden)), w_hz=w(ks[6], (hidden, hidden)),
        w_hn=w(ks[7], (hidden, hidden)),
        b_r=w(ks[8], (1, hidden), 0.05), b_z=w(ks[9], (1, hidden), 0.05),
        b_in=w(ks[10], (1, hidden), 0.05), b_hn=w(ks[11], (1, hidden), 0.05),
        # LayerNorm applied to GRU outputs (not to the returned hxs)
        gru_ln_g=ones((1, hidden)), gru_ln_b=zeros((1, hidden)),
        # ACTLayer linear
        w_act=w(ks[12], (hidden, act_dim), 0.01), b_act=zeros((1, act_dim)),
    )


def prepare_params(p, lane=128):
    """Fuse GRU gate weights and lane-pad the ACT head for the kernels."""
    q = dict(p)
    A = p["w_act"].shape[1]
    Ap = _round_up(max(A, lane), lane)
    q["w_i"] = jnp.concatenate([p["w_ir"], p["w_iz"], p["w_in"]], axis=1)    # (H, 3H)
    q["b_i3"] = jnp.concatenate([p["b_r"], p["b_z"], p["b_in"]], axis=1)     # (1, 3H)
    q["w_h"] = jnp.concatenate([p["w_hr"], p["w_hz"], p["w_hn"]], axis=1)    # (H, 3H)
    q["w_act_pad"] = jnp.pad(p["w_act"], ((0, 0), (0, Ap - A)))              # (H, Ap)
    q["b_act_pad"] = jnp.pad(p["b_act"], ((0, 0), (0, Ap - A)))              # (1, Ap)
    return q


# ------------------------------ pure-JAX reference ---------------------------
def _ln_ref(x, gamma, beta):
    mu = jnp.mean(x, axis=-1, keepdims=True)
    var = jnp.mean((x - mu) ** 2, axis=-1, keepdims=True)
    return (x - mu) * jax.lax.rsqrt(var + LN_EPS) * gamma + beta


def reference_forward(p, obs, rnn_states):
    T, B, D = obs.shape
    x = obs.reshape(T * B, D)
    x = _ln_ref(x, p["fn_g"], p["fn_b"])
    h = jnp.maximum(x @ p["w1"] + p["b1"], 0.0)
    h = _ln_ref(h, p["ln1_g"], p["ln1_b"])
    h = jnp.maximum(h @ p["w2"] + p["b2"], 0.0)
    h = _ln_ref(h, p["ln2_g"], p["ln2_b"])
    mlp_out = h.reshape(T, B, -1)

    hh = rnn_states[0]
    logits = []
    for t in range(T):
        xt = mlp_out[t]
        r = jax.nn.sigmoid(xt @ p["w_ir"] + hh @ p["w_hr"] + p["b_r"])
        z = jax.nn.sigmoid(xt @ p["w_iz"] + hh @ p["w_hz"] + p["b_z"])
        n = jnp.tanh(xt @ p["w_in"] + p["b_in"] + r * (hh @ p["w_hn"] + p["b_hn"]))
        hh = (1.0 - z) * n + z * hh
        y = _ln_ref(hh, p["gru_ln_g"], p["gru_ln_b"])
        logits.append(y @ p["w_act"] + p["b_act"])
    return jnp.stack(logits, axis=0), hh[None]


if __name__ == "__main__":
    T, B = 8, 4
    obs_dim, act_dim, hidden = 12, 4, 32

    key = jax.random.PRNGKey(0)
    k_obs, k_h, k_p = jax.random.split(key, 3)
    obs = jax.random.normal(k_obs, (T, B, obs_dim), jnp.float32)
    rnn_states = jax.random.normal(k_h, (1, B, hidden), jnp.float32)
    params = prepare_params(init_params(k_p, obs_dim, act_dim, hidden))

    act_outs, h_final = r_maddpg_actor_forward(params, obs, None, rnn_states,
                                               take_prev_act=False)
    act_outs = jax.block_until_ready(act_outs)
    h_final = jax.block_until_ready(h_final)

    ref_act, ref_h = reference_forward(params, obs, rnn_states)
    assert act_outs.shape == (T, B, act_dim)
    assert h_final.shape == (1, B, hidden)
    assert jnp.allclose(act_outs, ref_act, atol=1e-3, rtol=1e-3)
    assert jnp.allclose(h_final, ref_h, atol=1e-3, rtol=1e-3)

    print("KERNEL_OK")
</pallas_src>

<mosaic_0001>
module attributes {stable_mosaic.version = 11 : i64} {
  func.func @mlp_proj_kernel(%arg0: i32, %arg1: memref<32x12xf32, #tpu.memory_space<vmem>>, %arg2: memref<1x12xf32, #tpu.memory_space<vmem>>, %arg3: memref<1x12xf32, #tpu.memory_space<vmem>>, %arg4: memref<12x32xf32, #tpu.memory_space<vmem>>, %arg5: memref<1x32xf32, #tpu.memory_space<vmem>>, %arg6: memref<1x32xf32, #tpu.memory_space<vmem>>, %arg7: memref<1x32xf32, #tpu.memory_space<vmem>>, %arg8: memref<32x32xf32, #tpu.memory_space<vmem>>, %arg9: memref<1x32xf32, #tpu.memory_space<vmem>>, %arg10: memref<1x32xf32, #tpu.memory_space<vmem>>, %arg11: memref<1x32xf32, #tpu.memory_space<vmem>>, %arg12: memref<32x96xf32, #tpu.memory_space<vmem>>, %arg13: memref<1x96xf32, #tpu.memory_space<vmem>>, %arg14: memref<32x96xf32, #tpu.memory_space<vmem>>) attributes {dimension_semantics = [#tpu.dimension_semantics<parallel>], iteration_bounds = array<i64: 1>, scalar_prefetch = 0 : i64, scratch_operands = 0 : i64, tpu.core_type = #tpu.core_type<tc>, window_params = [{transform_indices = @transform_0, window_bounds = array<i64: 32, 12>}, {pipeline_mode = #tpu.pipeline_mode<synchronous>, transform_indices = @transform_1, window_bounds = array<i64: 1, 12>}, {pipeline_mode = #tpu.pipeline_mode<synchronous>, transform_indices = @transform_2, window_bounds = array<i64: 1, 12>}, {pipeline_mode = #tpu.pipeline_mode<synchronous>, transform_indices = @transform_3, window_bounds = array<i64: 12, 32>}, {pipeline_mode = #tpu.pipeline_mode<synchronous>, transform_indices = @transform_4, window_bounds = array<i64: 1, 32>}, {pipeline_mode = #tpu.pipeline_mode<synchronous>, transform_indices = @transform_5, window_bounds = array<i64: 1, 32>}, {pipeline_mode = #tpu.pipeline_mode<synchronous>, transform_indices = @transform_6, window_bounds = array<i64: 1, 32>}, {pipeline_mode = #tpu.pipeline_mode<synchronous>, transform_indices = @transform_7, window_bounds = array<i64: 32, 32>}, {pipeline_mode = #tpu.pipeline_mode<synchronous>, transform_indices = @transform_8, window_bounds = array<i64: 1, 32>}, {pipeline_mode = #tpu.pipeline_mode<synchronous>, transform_indices = @transform_9, window_bounds = array<i64: 1, 32>}, {pipeline_mode = #tpu.pipeline_mode<synchronous>, transform_indices = @transform_10, window_bounds = array<i64: 1, 32>}, {pipeline_mode = #tpu.pipeline_mode<synchronous>, transform_indices = @transform_11, window_bounds = array<i64: 32, 96>}, {pipeline_mode = #tpu.pipeline_mode<synchronous>, transform_indices = @transform_12, window_bounds = array<i64: 1, 96>}, {transform_indices = @transform_13, window_bounds = array<i64: 32, 96>}]} {
    %c0 = arith.constant 0 : index
    %c0_0 = arith.constant 0 : index
    %0 = vector.load %arg1[%c0, %c0_0] : memref<32x12xf32, #tpu.memory_space<vmem>>, vector<32x12xf32>
    %c0_1 = arith.constant 0 : index
    %c0_2 = arith.constant 0 : index
    %1 = vector.load %arg2[%c0_1, %c0_2] : memref<1x12xf32, #tpu.memory_space<vmem>>, vector<1x12xf32>
    %c0_3 = arith.constant 0 : index
    %c0_4 = arith.constant 0 : index
    %2 = vector.load %arg3[%c0_3, %c0_4] : memref<1x12xf32, #tpu.memory_space<vmem>>, vector<1x12xf32>
    %cst = arith.constant dense<0.000000e+00> : vector<32xf32>
    %3 = vector.multi_reduction <add>, %0, %cst [1] : vector<32x12xf32> to vector<32xf32>
    %4 = vector.shape_cast %3 : vector<32xf32> to vector<32x1xf32>
    %5 = arith.mulf %0, %0 : vector<32x12xf32>
    %cst_5 = arith.constant dense<0.000000e+00> : vector<32xf32>
    %6 = vector.multi_reduction <add>, %5, %cst_5 [1] : vector<32x12xf32> to vector<32xf32>
    %7 = vector.shape_cast %6 : vector<32xf32> to vector<32x1xf32>
    %cst_6 = arith.constant 0.0833333358 : f32
    %8 = vector.broadcast %cst_6 : f32 to vector<32x1xf32>
    %9 = arith.mulf %4, %8 : vector<32x1xf32>
    %cst_7 = arith.constant 0.0833333358 : f32
    %10 = vector.broadcast %cst_7 : f32 to vector<32x1xf32>
    %11 = arith.mulf %7, %10 : vector<32x1xf32>
    %12 = arith.mulf %9, %9 : vector<32x1xf32>
    %13 = arith.subf %11, %12 : vector<32x1xf32>
    %cst_8 = arith.constant 0.000000e+00 : f32
    %14 = vector.broadcast %cst_8 : f32 to vector<32x1xf32>
    %15 = arith.maximumf %13, %14 : vector<32x1xf32>
    %16 = vector.broadcast %9 : vector<32x1xf32> to vector<32x12xf32>
    %17 = arith.subf %0, %16 : vector<32x12xf32>
    %cst_9 = arith.constant 9.99999974E-6 : f32
    %18 = vector.broadcast %cst_9 : f32 to vector<32x1xf32>
    %19 = arith.addf %15, %18 : vector<32x1xf32>
    %20 = math.rsqrt %19 : vector<32x1xf32>
    %21 = vector.broadcast %20 : vector<32x1xf32> to vector<32x12xf32>
    %22 = arith.mulf %17, %21 : vector<32x12xf32>
    %23 = vector.broadcast %1 : vector<1x12xf32> to vector<32x12xf32>
    %24 = arith.mulf %22, %23 : vector<32x12xf32>
    %25 = vector.broadcast %2 : vector<1x12xf32> to vector<32x12xf32>
    %26 = arith.addf %24, %25 : vector<32x12xf32>
    %c0_10 = arith.constant 0 : index
    %c0_11 = arith.constant 0 : index
    %27 = vector.load %arg4[%c0_10, %c0_11] : memref<12x32xf32, #tpu.memory_space<vmem>>, vector<12x32xf32>
    %cst_12 = arith.constant dense<0.000000e+00> : vector<32x32xf32>
    %28 = tpu.matmul %26, %27, %cst_12 {dimension_numbers = #tpu.dot_dimension_numbers<[1], [0], [0], [1], [0, 0, 1, 1], [], []>} : vector<32x12xf32>, vector<12x32xf32>, vector<32x32xf32> -> vector<32x32xf32>
    %c0_13 = arith.constant 0 : index
    %c0_14 = arith.constant 0 : index
    %29 = vector.load %arg5[%c0_13, %c0_14] : memref<1x32xf32, #tpu.memory_space<vmem>>, vector<1x32xf32>
    %30 = vector.broadcast %29 : vector<1x32xf32> to vector<32x32xf32>
    %31 = arith.addf %28, %30 : vector<32x32xf32>
    %cst_15 = arith.constant 0.000000e+00 : f32
    %32 = vector.broadcast %cst_15 : f32 to vector<32x32xf32>
    %33 = arith.maximumf %31, %32 : vector<32x32xf32>
    %c0_16 = arith.constant 0 : index
    %c0_17 = arith.constant 0 : index
    %34 = vector.load %arg6[%c0_16, %c0_17] : memref<1x32xf32, #tpu.memory_space<vmem>>, vector<1x32xf32>
    %c0_18 = arith.constant 0 : index
    %c0_19 = arith.constant 0 : index
    %35 = vector.load %arg7[%c0_18, %c0_19] : memref<1x32xf32, #tpu.memory_space<vmem>>, vector<1x32xf32>
    %cst_20 = arith.constant dense<0.000000e+00> : vector<32xf32>
    %36 = vector.multi_reduction <add>, %33, %cst_20 [1] : vector<32x32xf32> to vector<32xf32>
    %37 = vector.shape_cast %36 : vector<32xf32> to vector<32x1xf32>
    %38 = arith.mulf %33, %33 : vector<32x32xf32>
    %cst_21 = arith.constant dense<0.000000e+00> : vector<32xf32>
    %39 = vector.multi_reduction <add>, %38, %cst_21 [1] : vector<32x32xf32> to vector<32xf32>
    %40 = vector.shape_cast %39 : vector<32xf32> to vector<32x1xf32>
    %cst_22 = arith.constant 3.125000e-02 : f32
    %41 = vector.broadcast %cst_22 : f32 to vector<32x1xf32>
    %42 = arith.mulf %37, %41 : vector<32x1xf32>
    %cst_23 = arith.constant 3.125000e-02 : f32
    %43 = vector.broadcast %cst_23 : f32 to vector<32x1xf32>
    %44 = arith.mulf %40, %43 : vector<32x1xf32>
    %45 = arith.mulf %42, %42 : vector<32x1xf32>
    %46 = arith.subf %44, %45 : vector<32x1xf32>
    %cst_24 = arith.constant 0.000000e+00 : f32
    %47 = vector.broadcast %cst_24 : f32 to vector<32x1xf32>
    %48 = arith.maximumf %46, %47 : vector<32x1xf32>
    %49 = vector.broadcast %42 : vector<32x1xf32> to vector<32x32xf32>
    %50 = arith.subf %33, %49 : vector<32x32xf32>
    %cst_25 = arith.constant 9.99999974E-6 : f32
    %51 = vector.broadcast %cst_25 : f32 to vector<32x1xf32>
    %52 = arith.addf %48, %51 : vector<32x1xf32>
    %53 = math.rsqrt %52 : vector<32x1xf32>
    %54 = vector.broadcast %53 : vector<32x1xf32> to vector<32x32xf32>
    %55 = arith.mulf %50, %54 : vector<32x32xf32>
    %56 = vector.broadcast %34 : vector<1x32xf32> to vector<32x32xf32>
    %57 = arith.mulf %55, %56 : vector<32x32xf32>
    %58 = vector.broadcast %35 : vector<1x32xf32> to vector<32x32xf32>
    %59 = arith.addf %57, %58 : vector<32x32xf32>
    %c0_26 = arith.constant 0 : index
    %c0_27 = arith.constant 0 : index
    %60 = vector.load %arg8[%c0_26, %c0_27] : memref<32x32xf32, #tpu.memory_space<vmem>>, vector<32x32xf32>
    %cst_28 = arith.constant dense<0.000000e+00> : vector<32x32xf32>
    %61 = tpu.matmul %59, %60, %cst_28 {dimension_numbers = #tpu.dot_dimension_numbers<[1], [0], [0], [1], [0, 0, 1, 1], [], []>} : vector<32x32xf32>, vector<32x32xf32>, vector<32x32xf32> -> vector<32x32xf32>
    %c0_29 = arith.constant 0 : index
    %c0_30 = arith.constant 0 : index
    %62 = vector.load %arg9[%c0_29, %c0_30] : memref<1x32xf32, #tpu.memory_space<vmem>>, vector<1x32xf32>
    %63 = vector.broadcast %62 : vector<1x32xf32> to vector<32x32xf32>
    %64 = arith.addf %61, %63 : vector<32x32xf32>
    %cst_31 = arith.constant 0.000000e+00 : f32
    %65 = vector.broadcast %cst_31 : f32 to vector<32x32xf32>
    %66 = arith.maximumf %64, %65 : vector<32x32xf32>
    %c0_32 = arith.constant 0 : index
    %c0_33 = arith.constant 0 : index
    %67 = vector.load %arg10[%c0_32, %c0_33] : memref<1x32xf32, #tpu.memory_space<vmem>>, vector<1x32xf32>
    %c0_34 = arith.constant 0 : index
    %c0_35 = arith.constant 0 : index
    %68 = vector.load %arg11[%c0_34, %c0_35] : memref<1x32xf32, #tpu.memory_space<vmem>>, vector<1x32xf32>
    %cst_36 = arith.constant dense<0.000000e+00> : vector<32xf32>
    %69 = vector.multi_reduction <add>, %66, %cst_36 [1] : vector<32x32xf32> to vector<32xf32>
    %70 = vector.shape_cast %69 : vector<32xf32> to vector<32x1xf32>
    %71 = arith.mulf %66, %66 : vector<32x32xf32>
    %cst_37 = arith.constant dense<0.000000e+00> : vector<32xf32>
    %72 = vector.multi_reduction <add>, %71, %cst_37 [1] : vector<32x32xf32> to vector<32xf32>
    %73 = vector.shape_cast %72 : vector<32xf32> to vector<32x1xf32>
    %cst_38 = arith.constant 3.125000e-02 : f32
    %74 = vector.broadcast %cst_38 : f32 to vector<32x1xf32>
    %75 = arith.mulf %70, %74 : vector<32x1xf32>
    %cst_39 = arith.constant 3.125000e-02 : f32
    %76 = vector.broadcast %cst_39 : f32 to vector<32x1xf32>
    %77 = arith.mulf %73, %76 : vector<32x1xf32>
    %78 = arith.mulf %75, %75 : vector<32x1xf32>
    %79 = arith.subf %77, %78 : vector<32x1xf32>
    %cst_40 = arith.constant 0.000000e+00 : f32
    %80 = vector.broadcast %cst_40 : f32 to vector<32x1xf32>
    %81 = arith.maximumf %79, %80 : vector<32x1xf32>
    %82 = vector.broadcast %75 : vector<32x1xf32> to vector<32x32xf32>
    %83 = arith.subf %66, %82 : vector<32x32xf32>
    %cst_41 = arith.constant 9.99999974E-6 : f32
    %84 = vector.broadcast %cst_41 : f32 to vector<32x1xf32>
    %85 = arith.addf %81, %84 : vector<32x1xf32>
    %86 = math.rsqrt %85 : vector<32x1xf32>
    %87 = vector.broadcast %86 : vector<32x1xf32> to vector<32x32xf32>
    %88 = arith.mulf %83, %87 : vector<32x32xf32>
    %89 = vector.broadcast %67 : vector<1x32xf32> to vector<32x32xf32>
    %90 = arith.mulf %88, %89 : vector<32x32xf32>
    %91 = vector.broadcast %68 : vector<1x32xf32> to vector<32x32xf32>
    %92 = arith.addf %90, %91 : vector<32x32xf32>
    %c0_42 = arith.constant 0 : index
    %c0_43 = arith.constant 0 : index
    %93 = vector.load %arg12[%c0_42, %c0_43] : memref<32x96xf32, #tpu.memory_space<vmem>>, vector<32x96xf32>
    %cst_44 = arith.constant dense<0.000000e+00> : vector<32x96xf32>
    %94 = tpu.matmul %92, %93, %cst_44 {dimension_numbers = #tpu.dot_dimension_numbers<[1], [0], [0], [1], [0, 0, 1, 1], [], []>} : vector<32x32xf32>, vector<32x96xf32>, vector<32x96xf32> -> vector<32x96xf32>
    %c0_45 = arith.constant 0 : index
    %c0_46 = arith.constant 0 : index
    %95 = vector.load %arg13[%c0_45, %c0_46] : memref<1x96xf32, #tpu.memory_space<vmem>>, vector<1x96xf32>
    %96 = vector.broadcast %95 : vector<1x96xf32> to vector<32x96xf32>
    %97 = arith.addf %94, %96 : vector<32x96xf32>
    %c0_47 = arith.constant 0 : index
    %c0_48 = arith.constant 0 : index
    %98 = vector.load %arg14[%c0_47, %c0_48] : memref<32x96xf32, #tpu.memory_space<vmem>>, vector<32x96xf32>
    tpu.vector_store %arg14[%c0_47, %c0_48], %97 {strides = array<i32>} : memref<32x96xf32, #tpu.memory_space<vmem>>, vector<32x96xf32>,
    return
  }
  func.func @transform_0(%arg0: i32) -> (i32, i32) {
    %c0_i32 = arith.constant 0 : i32
    %c0_i32_0 = arith.constant 0 : i32
    return %arg0, %c0_i32 : i32, i32
  }
  func.func @transform_1(%arg0: i32) -> (i32, i32) {
    %c0_i32 = arith.constant 0 : i32
    %c0_i32_0 = arith.constant 0 : i32
    %c0_i32_1 = arith.constant 0 : i32
    return %c0_i32, %c0_i32_0 : i32, i32
  }
  func.func @transform_2(%arg0: i32) -> (i32, i32) {
    %c0_i32 = arith.constant 0 : i32
    %c0_i32_0 = arith.constant 0 : i32
    %c0_i32_1 = arith.constant 0 : i32
    return %c0_i32, %c0_i32_0 : i32, i32
  }
  func.func @transform_3(%arg0: i32) -> (i32, i32) {
    %c0_i32 = arith.constant 0 : i32
    %c0_i32_0 = arith.constant 0 : i32
    %c0_i32_1 = arith.constant 0 : i32
    return %c0_i32, %c0_i32_0 : i32, i32
  }
  func.func @transform_4(%arg0: i32) -> (i32, i32) {
    %c0_i32 = arith.constant 0 : i32
    %c0_i32_0 = arith.constant 0 : i32
    %c0_i32_1 = arith.constant 0 : i32
    return %c0_i32, %c0_i32_0 : i32, i32
  }
  func.func @transform_5(%arg0: i32) -> (i32, i32) {
    %c0_i32 = arith.constant 0 : i32
    %c0_i32_0 = arith.constant 0 : i32
    %c0_i32_1 = arith.constant 0 : i32
    return %c0_i32, %c0_i32_0 : i32, i32
  }
  func.func @transform_6(%arg0: i32) -> (i32, i32) {
    %c0_i32 = arith.constant 0 : i32
    %c0_i32_0 = arith.constant 0 : i32
    %c0_i32_1 = arith.constant 0 : i32
    return %c0_i32, %c0_i32_0 : i32, i32
  }
  func.func @transform_7(%arg0: i32) -> (i32, i32) {
    %c0_i32 = arith.constant 0 : i32
    %c0_i32_0 = arith.constant 0 : i32
    %c0_i32_1 = arith.constant 0 : i32
    return %c0_i32, %c0_i32_0 : i32, i32
  }
  func.func @transform_8(%arg0: i32) -> (i32, i32) {
    %c0_i32 = arith.constant 0 : i32
    %c0_i32_0 = arith.constant 0 : i32
    %c0_i32_1 = arith.constant 0 : i32
    return %c0_i32, %c0_i32_0 : i32, i32
  }
  func.func @transform_9(%arg0: i32) -> (i32, i32) {
    %c0_i32 = arith.constant 0 : i32
    %c0_i32_0 = arith.constant 0 : i32
    %c0_i32_1 = arith.constant 0 : i32
    return %c0_i32, %c0_i32_0 : i32, i32
  }
  func.func @transform_10(%arg0: i32) -> (i32, i32) {
    %c0_i32 = arith.constant 0 : i32
    %c0_i32_0 = arith.constant 0 : i32
    %c0_i32_1 = arith.constant 0 : i32
    return %c0_i32, %c0_i32_0 : i32, i32
  }
  func.func @transform_11(%arg0: i32) -> (i32, i32) {
    %c0_i32 = arith.constant 0 : i32
    %c0_i32_0 = arith.constant 0 : i32
    %c0_i32_1 = arith.constant 0 : i32
    return %c0_i32, %c0_i32_0 : i32, i32
  }
  func.func @transform_12(%arg0: i32) -> (i32, i32) {
    %c0_i32 = arith.constant 0 : i32
    %c0_i32_0 = arith.constant 0 : i32
    %c0_i32_1 = arith.constant 0 : i32
    return %c0_i32, %c0_i32_0 : i32, i32
  }
  func.func @transform_13(%arg0: i32) -> (i32, i32) {
    %c0_i32 = arith.constant 0 : i32
    %c0_i32_0 = arith.constant 0 : i32
    return %arg0, %c0_i32 : i32, i32
  }
}

</mosaic_0001>

<llo_original>
// kernel: tpu_custom_call.1
$region0: #{tpu_custom_call.1}
  #allocation0 [shape = 'u32[]', space=smem, size = 0x4, offset = 0x4, fixed_abs, tag = 'smem constant byte address 0x4 - core index']
  #allocation1 [shape = 'u32[144,128]{1,0:T(1,128)}', space=vmem, size = 0x12000, scoped, tag = 'internal scratch']
  %s0 = inlined_call_operand.vmem [shape: f32[32,12], index: 0, kind: input, shape index: {}]
  %s1 = inlined_call_operand.vmem [shape: f32[1,12], index: 1, kind: input, shape index: {}]
  %s2 = inlined_call_operand.vmem [shape: f32[1,12], index: 2, kind: input, shape index: {}]
  %s3 = inlined_call_operand.hbm [shape: f32[12,32], index: 3, kind: input, shape index: {}]
  %s4 = inlined_call_operand.hbm [shape: f32[1,32], index: 4, kind: input, shape index: {}]
  %s5 = inlined_call_operand.hbm [shape: f32[1,32], index: 5, kind: input, shape index: {}]
  %s6 = inlined_call_operand.vmem [shape: f32[1,32], index: 6, kind: input, shape index: {}]
  %s7 = inlined_call_operand.vmem [shape: f32[32,32], index: 7, kind: input, shape index: {}]
  %s8 = inlined_call_operand.vmem [shape: f32[1,32], index: 8, kind: input, shape index: {}]
  %s9 = inlined_call_operand.vmem [shape: f32[1,32], index: 9, kind: input, shape index: {}]
  %s10 = inlined_call_operand.vmem [shape: f32[1,32], index: 10, kind: input, shape index: {}]
  %s11 = inlined_call_operand.vmem [shape: f32[32,96], index: 11, kind: input, shape index: {}]
  %s12 = inlined_call_operand.vmem [shape: f32[1,96], index: 12, kind: input, shape index: {}]
  %s13 = inlined_call_operand.hbm [shape: f32[32,96], index: 13, kind: output, shape index: {}]
  %s14 = sld [smem:[#allocation0]]
  $region74: #{tpu_custom_call.1} parent=0
    _
  %s16 = ssub.s32 1, %s14
  %s17 = scalar_select 0, %s16, %s14
  $region1: #{tpu_custom_call.1} parent=0
    #allocation2 [shape = 'u8[8192]{0}', space=vmem, size = 0x2000, scoped, tag = 'input window, operand 3, single buffered']
    #allocation3 [shape = 's32[1]{0}', space=sflag, size = 0x4, scoped, tag = 'scoped memory for tpu_custom_call.1']
    #allocation4 [shape = 's32[1]{0}', space=sflag, size = 0x4, scoped, tag = 'scoped memory for tpu_custom_call.1']
    #allocation5 [shape = 'u8[512]{0}', space=vmem, size = 0x400, scoped, tag = 'input window, operand 4, single buffered']
    #allocation6 [shape = 's32[1]{0}', space=sflag, size = 0x4, scoped, tag = 'scoped memory for tpu_custom_call.1']
    #allocation7 [shape = 'u8[512]{0}', space=vmem, size = 0x400, scoped, tag = 'input window, operand 5, single buffered']
    #allocation8 [shape = 'u8[16384]{0}', space=vmem, size = 0x4000, scoped, tag = 'output window, operand 0, single buffered']
    %18 = vsyncpa [#allocation3], 0
    %19 = vsyncpa [#allocation6], 0
    %20 = vsyncpa [#allocation4], 0
    // Predicated region
    $region2: #{tpu_custom_call.1} parent=1 // pred_check
      _
    $region3: #{tpu_custom_call.1} parent=1 // pred_check_branch
      %22 = sbr.rel (0) target = $region5
    $region4: #{tpu_custom_call.1} parent=1 // pred_region
      _
    $region5: #{tpu_custom_call.1} parent=1 // pred_fallthru
      _
    // Predicated region
    $region6: #{tpu_custom_call.1} parent=1 // pred_check
      _
    $region7: #{tpu_custom_call.1} parent=1 // pred_check_branch
      %24 = sbr.rel (0) target = $region9
    $region8: #{tpu_custom_call.1} parent=1 // pred_region
      _
    $region9: #{tpu_custom_call.1} parent=1 // pred_fallthru
      _
    // Predicated region
    $region10: #{tpu_custom_call.1} parent=1 // pred_check
      _
    $region11: #{tpu_custom_call.1} parent=1 // pred_check_branch
      %26 = sbr.rel (0) target = $region13
    $region12: #{tpu_custom_call.1} parent=1 // pred_region
      _
    $region13: #{tpu_custom_call.1} parent=1 // pred_fallthru
      _
    // Predicated region
    $region14: #{tpu_custom_call.1} parent=1 // pred_check
      _
    $region15: #{tpu_custom_call.1} parent=1 // pred_check_branch
      %28 = sbr.rel (0) target = $region17
    $region16: #{tpu_custom_call.1} parent=1 // pred_region
      %s30 = ssub.s32 256, 256
      %31 = vsyncadd [#allocation3], %s30
      %s32 = sshll.u32 [#allocation2], 4
      %s33 = int_to_ptr.vmem [resolvable:$true] %s32
      %38 = dma.hbm_to_vmem [thread:$0]  %s3, 256, %s33, [#allocation3], 128, 128, 8
    $region17: #{tpu_custom_call.1} parent=1 // pred_fallthru
      _
    // Predicated region
    $region18: #{tpu_custom_call.1} parent=1 // pred_check
      _
    $region19: #{tpu_custom_call.1} parent=1 // pred_check_branch
      %40 = sbr.rel (0) target = $region21
    $region20: #{tpu_custom_call.1} parent=1 // pred_region
      %s42 = ssub.s32 16, 16
      %43 = vsyncadd [#allocation6], %s42
      %s45 = sshll.u32 [#allocation5], 4
      %s46 = int_to_ptr.vmem [resolvable:$true] %s45
      %48 = dma.hbm_to_vmem [thread:$0]  %s4, 16, %s46, [#allocation6]
    $region21: #{tpu_custom_call.1} parent=1 // pred_fallthru
      _
    // Predicated region
    $region22: #{tpu_custom_call.1} parent=1 // pred_check
      _
    $region23: #{tpu_custom_call.1} parent=1 // pred_check_branch
      %50 = sbr.rel (0) target = $region25
    $region24: #{tpu_custom_call.1} parent=1 // pred_region
      %s52 = ssub.s32 16, 16
      %53 = vsyncadd [#allocation6], %s52
      %s55 = sshll.u32 [#allocation7], 4
      %s56 = int_to_ptr.vmem [resolvable:$true] %s55
      %58 = dma.hbm_to_vmem [thread:$0]  %s5, 16, %s56, [#allocation6]
    $region25: #{tpu_custom_call.1} parent=1 // pred_fallthru
      _
    // Predicated region
    $region26: #{tpu_custom_call.1} parent=1 // pred_check
      _
    $region27: #{tpu_custom_call.1} parent=1 // pred_check_branch
      %60 = sbr.rel (0) target = $region29
    $region28: #{tpu_custom_call.1} parent=1 // pred_region
      _
    $region29: #{tpu_custom_call.1} parent=1 // pred_fallthru
      _
    // Predicated region
    $region30: #{tpu_custom_call.1} parent=1 // pred_check
      _
    $region31: #{tpu_custom_call.1} parent=1 // pred_check_branch
      %62 = sbr.rel (0) target = $region33
    $region32: #{tpu_custom_call.1} parent=1 // pred_region
      _
    $region33: #{tpu_custom_call.1} parent=1 // pred_fallthru
      _
    // Predicated region
    $region34: #{tpu_custom_call.1} parent=1 // pred_check
      _
    $region35: #{tpu_custom_call.1} parent=1 // pred_check_branch
      %64 = sbr.rel (0) target = $region37
    $region36: #{tpu_custom_call.1} parent=1 // pred_region
      _
    $region37: #{tpu_custom_call.1} parent=1 // pred_fallthru
      _
    // Predicated region
    $region38: #{tpu_custom_call.1} parent=1 // pred_check
      _
    $region39: #{tpu_custom_call.1} parent=1 // pred_check_branch
      %66 = sbr.rel (0) target = $region41
    $region40: #{tpu_custom_call.1} parent=1 // pred_region
      _
    $region41: #{tpu_custom_call.1} parent=1 // pred_fallthru
      _
    // Predicated region
    $region42: #{tpu_custom_call.1} parent=1 // pred_check
      _
    $region43: #{tpu_custom_call.1} parent=1 // pred_check_branch
      %68 = sbr.rel (0) target = $region45
    $region44: #{tpu_custom_call.1} parent=1 // pred_region
      _
    $region45: #{tpu_custom_call.1} parent=1 // pred_fallthru
      _
    // Predicated region
    $region46: #{tpu_custom_call.1} parent=1 // pred_check
      _
    $region47: #{tpu_custom_call.1} parent=1 // pred_check_branch
      %70 = sbr.rel (0) target = $region49
    $region48: #{tpu_custom_call.1} parent=1 // pred_region
      _
    $region49: #{tpu_custom_call.1} parent=1 // pred_fallthru
      _
    // Predicated region
    $region50: #{tpu_custom_call.1} parent=1 // pred_check
      _
    $region51: #{tpu_custom_call.1} parent=1 // pred_check_branch
      %72 = sbr.rel (0) target = $region53
    $region52: #{tpu_custom_call.1} parent=1 // pred_region
      _
    $region53: #{tpu_custom_call.1} parent=1 // pred_fallthru
      _
    // Predicated region
    $region54: #{tpu_custom_call.1} parent=1 // pred_check
      _
    $region55: #{tpu_custom_call.1} parent=1 // pred_check_branch
      %74 = sbr.rel (0) target = $region57
    $region56: #{tpu_custom_call.1} parent=1 // pred_region
      %75 = dma.done [#allocation3], 256
    $region57: #{tpu_custom_call.1} parent=1 // pred_fallthru
      _
    // Predicated region
    $region58: #{tpu_custom_call.1} parent=1 // pred_check
      _
    $region59: #{tpu_custom_call.1} parent=1 // pred_check_branch
      %77 = sbr.rel (0) target = $region61
    $region60: #{tpu_custom_call.1} parent=1 // pred_region
      %78 = dma.done [#allocation6], 16
    $region61: #{tpu_custom_call.1} parent=1 // pred_fallthru
      _
    // Predicated region
    $region62: #{tpu_custom_call.1} parent=1 // pred_check
      _
    $region63: #{tpu_custom_call.1} parent=1 // pred_check_branch
      %80 = sbr.rel (0) target = $region65
    $region64: #{tpu_custom_call.1} parent=1 // pred_region
      %81 = dma.done [#allocation6], 16
    $region65: #{tpu_custom_call.1} parent=1 // pred_fallthru
      _
    %v82 = vld [vmem:[%s0] sm:$0xff]
    %v83 = vld [vmem:[%s0 + $0x8] sm:$0xff]
    %v84 = vld [vmem:[%s0 + $0x10] sm:$0xff]
    %v85 = vld [vmem:[%s0 + $0x18] sm:$0xff]
    %v86 = vld [vmem:[%s1] sm:$0x1]
    %v87 = vld [vmem:[%s2] sm:$0x1]
    %vm88 = vcmask 97280
    %v89 = vsel %vm88, %v82, 0.0
    %90 = vadd.xlane.f32.xlu0 %v89
    %v91 = vpop.xlane.xlu0 %90
    %v92 = vsel %vm88, %v83, 0.0
    %93 = vadd.xlane.f32.xlu0 %v92
    %v94 = vpop.xlane.xlu0 %93
    %v95 = vsel %vm88, %v84, 0.0
    %96 = vadd.xlane.f32.xlu0 %v95
    %v97 = vpop.xlane.xlu0 %96
    %v98 = vsel %vm88, %v85, 0.0
    %99 = vadd.xlane.f32.xlu0 %v98
    %v100 = vpop.xlane.xlu0 %99
    %v101 = vmul.f32 %v82, %v82
    %v102 = vmul.f32 %v83, %v83
    %v103 = vmul.f32 %v84, %v84
    %v104 = vmul.f32 %v85, %v85
    %v105 = vsel %vm88, %v101, 0.0
    %106 = vadd.xlane.f32.xlu0 %v105
    %v107 = vpop.xlane.xlu0 %106
    %v108 = vsel %vm88, %v102, 0.0
    %109 = vadd.xlane.f32.xlu0 %v108
    %v110 = vpop.xlane.xlu0 %109
    %v111 = vsel %vm88, %v103, 0.0
    %112 = vadd.xlane.f32.xlu0 %v111
    %v113 = vpop.xlane.xlu0 %112
    %v114 = vsel %vm88, %v104, 0.0
    %115 = vadd.xlane.f32.xlu0 %v114
    %v116 = vpop.xlane.xlu0 %115
    %v117 = vmul.f32 %v91, 0.083333336
    %v118 = vmul.f32 %v94, 0.083333336
    %v119 = vmul.f32 %v97, 0.083333336
    %v120 = vmul.f32 %v100, 0.083333336
    %v121 = vmul.f32 %v107, 0.083333336
    %v122 = vmul.f32 %v110, 0.083333336
    %v123 = vmul.f32 %v113, 0.083333336
    %v124 = vmul.f32 %v116, 0.083333336
    %v125 = vmul.f32 %v117, %v117
    %v126 = vmul.f32 %v118, %v118
    %v127 = vmul.f32 %v119, %v119
    %v128 = vmul.f32 %v120, %v120
    %v129 = vsub.f32 %v121, %v125
    %v130 = vsub.f32 %v122, %v126
    %v131 = vsub.f32 %v123, %v127
    %v132 = vsub.f32 %v124, %v128
    %v133 = vmax.f32 %v129, 0.0
    %v134 = vmax.f32 %v130, 0.0
    %v135 = vmax.f32 %v131, 0.0
    %v136 = vmax.f32 %v132, 0.0
    %v137 = vsub.f32 %v82, %v117
    %v138 = vsub.f32 %v83, %v118
    %v139 = vsub.f32 %v84, %v119
    %v140 = vsub.f32 %v85, %v120
    %v141 = vadd.f32 %v133, 1e-05
    %v142 = vadd.f32 %v134, 1e-05
    %v143 = vadd.f32 %v135, 1e-05
    %v144 = vadd.f32 %v136, 1e-05
    %v145 = vrsqrt.pop %v141
    %v146 = vrsqrt.pop %v142
    %v147 = vrsqrt.pop %v143
    %v148 = vrsqrt.pop %v144
    %v149 = vmul.f32 %v137, %v145
    %v150 = vmul.f32 %v138, %v146
    %v151 = vmul.f32 %v139, %v147
    %v152 = vmul.f32 %v140, %v148
    %v154 = vlaneseq
    %v155 = vshrl.u32 %v154, 7
    %v156 = vsub.s32 0, %v155
    %v157 = vrot.slane %v86, %v156
    %v159 = vmul.f32 %v149, %v157
    %v160 = vmul.f32 %v150, %v157
    %v161 = vmul.f32 %v151, %v157
    %v162 = vmul.f32 %v152, %v157
    %v164 = vlaneseq
    %v165 = vshrl.u32 %v164, 7
    %v166 = vsub.s32 0, %v165
    %v167 = vrot.slane %v87, %v166
    %v169 = vadd.f32 %v159, %v167
    %v170 = vadd.f32 %v160, %v167
    %v171 = vadd.f32 %v161, %v167
    %v172 = vadd.f32 %v162, %v167
    %v173 = vld [vmem:[#allocation2] sm:$0xff]
    %v174 = vld [vmem:[#allocation2 + $0x8] sm:$0xf]
    %v175 = vld [vmem:[#allocation5] sm:$0x1]
    %v177 = vlaneseq
    %v178 = vshrl.u32 %v177, 7
    %v179 = vsub.s32 0, %v178
    %v180 = vrot.slane %v175, %v179
    %v183 = vsel %vm88, %v169, 0
    %v186 = vsel %vm88, %v170, 0
    %v189 = vsel %vm88, %v171, 0
    %v192 = vsel %vm88, %v172, 0
    %vm194 = vcmask 1043456
    %v196 = vsel %vm194, %v174, 0
    %198 = vmatprep.subr.mxu0 0.0
    %199 = vmatpush1.msra.mxu0 %v173
    %200 = vmatprep.subr.mxu0 0.0
    %201 = vmatpush1.msra.mxu0 %v196
    %202 = vmatprep.subr.mxu0 0.0
    %203 = vmatpush1.msra.mxu0 0.0
    %204 = vmatprep.subr.mxu0 0.0
    %205 = vmatpush1.msra.mxu0 0.0
    %206 = vmatprep.subr.mxu0 0.0
    %207 = vmatpush1.msra.mxu0 0.0
    %208 = vmatprep.subr.mxu0 0.0
    %209 = vmatpush1.msra.mxu0 0.0
    %210 = vmatprep.subr.mxu0 0.0
    %211 = vmatpush1.msra.mxu0 0.0
    %212 = vmatprep.subr.mxu0 0.0
    %213 = vmatpush1.msra.mxu0 0.0
    %214 = vmatprep.subr.mxu0 0.0
    %215 = vmatpush1.msra.mxu0 0.0
    %216 = vmatprep.subr.mxu0 0.0
    %217 = vmatpush1.msra.mxu0 0.0
    %218 = vmatprep.subr.mxu0 0.0
    %219 = vmatpush1.msra.mxu0 0.0
    %220 = vmatprep.subr.mxu0 0.0
    %221 = vmatpush1.msra.mxu0 0.0
    %222 = vmatprep.subr.mxu0 0.0
    %223 = vmatpush1.msra.mxu0 0.0
    %224 = vmatprep.subr.mxu0 0.0
    %225 = vmatpush1.msra.mxu0 0.0
    %226 = vmatprep.subr.mxu0 0.0
    %227 = vmatpush1.msra.mxu0 0.0
    %228 = vmatprep.subr.mxu0 0.0
    %229 = vmatpush1.msra.mxu0 0.0
    %230 = vmatprep.subr.mxu0 0.0
    %231 = vmatpush1.msra.mxu0 0.0
    %232 = vmatprep.subr.mxu0 0.0
    %233 = vmatpush1.msra.mxu0 0.0
    %234 = vmatprep.subr.mxu0 0.0
    %235 = vmatpush1.msra.mxu0 0.0
    %236 = vmatprep.subr.mxu0 0.0
    %237 = vmatpush1.msra.mxu0 0.0
    %238 = vmatprep.subr.mxu0 0.0
    %239 = vmatpush1.msra.mxu0 0.0
    %240 = vmatprep.subr.mxu0 0.0
    %241 = vmatpush1.msra.mxu0 0.0
    %242 = vmatprep.subr.mxu0 0.0
    %243 = vmatpush1.msra.mxu0 0.0
    %244 = vmatprep.subr.mxu0 0.0
    %245 = vmatpush1.msra.mxu0 0.0
    %246 = vmatprep.subr.mxu0 0.0
    %247 = vmatpush1.msra.mxu0 0.0
    %248 = vmatprep.subr.mxu0 0.0
    %249 = vmatpush1.msra.mxu0 0.0
    %250 = vmatprep.subr.mxu0 0.0
    %251 = vmatpush1.msra.mxu0 0.0
    %252 = vmatprep.subr.mxu0 0.0
    %253 = vmatpush1.msra.mxu0 0.0
    %254 = vmatprep.subr.mxu0 0.0
    %255 = vmatpush1.msra.mxu0 0.0
    %256 = vmatprep.subr.mxu0 0.0
    %257 = vmatpush1.msra.mxu0 0.0
    %258 = vmatprep.subr.mxu0 0.0
    %259 = vmatpush1.msra.mxu0 0.0
    %260 = vmatprep.subr.mxu0 0.0
    %261 = vmatpush1.msra.mxu0 0.0
    %262 = vmatprep.mubr.f32.mxu0 0.0
    %263 = vmatmul.mubr.f32.gmra.mrb[0].mxu0 %v183
    %v264 = vpop.f32.mrb[0].mxu0
    %v265 = vadd.f32 %v180, %v264
    %v266 = vpop.f32.mrb[0].mxu0
    %267 = vmatprep.mubr.f32.mxu0 0.0
    %268 = vmatmul.mubr.f32.gmra.mrb[0].mxu0 %v186
    %v269 = vpop.f32.mrb[0].mxu0
    %v270 = vadd.f32 %v180, %v269
    %v271 = vpop.f32.mrb[0].mxu0
    %272 = vmatprep.mubr.f32.mxu0 0.0
    %273 = vmatmul.mubr.f32.gmra.mrb[0].mxu0 %v189
    %v274 = vpop.f32.mrb[0].mxu0
    %v275 = vadd.f32 %v180, %v274
    %v276 = vpop.f32.mrb[0].mxu0
    %277 = vmatprep.mubr.f32.mxu0 0.0
    %278 = vmatmul.mubr.f32.gmra.mrb[0].mxu0 %v192
    %v279 = vpop.f32.mrb[0].mxu0
    %v280 = vadd.f32 %v180, %v279
    %v281 = vpop.f32.mrb[0].mxu0
    %282 = vdwg.mxu0
    %v283 = vmax.f32 %v265, 0.0
    %v284 = vmax.f32 %v270, 0.0
    %v285 = vmax.f32 %v275, 0.0
    %v286 = vmax.f32 %v280, 0.0
    %v287 = vld [vmem:[#allocation7] sm:$0x1]
    %v288 = vld [vmem:[%s6] sm:$0x1]
    %vm289 = vcmask 261120
    %v290 = vsel %vm289, %v283, 0.0
    %291 = vadd.xlane.f32.xlu0 %v290
    %v292 = vpop.xlane.xlu0 %291
    %v293 = vsel %vm289, %v284, 0.0
    %294 = vadd.xlane.f32.xlu0 %v293
    %v295 = vpop.xlane.xlu0 %294
    %v296 = vsel %vm289, %v285, 0.0
    %297 = vadd.xlane.f32.xlu0 %v296
    %v298 = vpop.xlane.xlu0 %297
    %v299 = vsel %vm289, %v286, 0.0
    %300 = vadd.xlane.f32.xlu0 %v299
    %v301 = vpop.xlane.xlu0 %300
    %v302 = vmul.f32 %v283, %v283
    %v303 = vmul.f32 %v284, %v284
    %v304 = vmul.f32 %v285, %v285
    %v305 = vmul.f32 %v286, %v286
    %v306 = vsel %vm289, %v302, 0.0
    %307 = vadd.xlane.f32.xlu0 %v306
    %v308 = vpop.xlane.xlu0 %307
    %v309 = vsel %vm289, %v303, 0.0
    %310 = vadd.xlane.f32.xlu0 %v309
    %v311 = vpop.xlane.xlu0 %310
    %v312 = vsel %vm289, %v304, 0.0
    %313 = vadd.xlane.f32.xlu0 %v312
    %v314 = vpop.xlane.xlu0 %313
    %v315 = vsel %vm289, %v305, 0.0
    %316 = vadd.xlane.f32.xlu0 %v315
    %v317 = vpop.xlane.xlu0 %316
    %v318 = vmul.f32 %v292, 0.03125
    %v319 = vmul.f32 %v295, 0.03125
    %v320 = vmul.f32 %v298, 0.03125
    %v321 = vmul.f32 %v301, 0.03125
    %v322 = vmul.f32 %v308, 0.03125
    %v323 = vmul.f32 %v311, 0.03125
    %v324 = vmul.f32 %v314, 0.03125
    %v325 = vmul.f32 %v317, 0.03125
    %v326 = vmul.f32 %v318, %v318
    %v327 = vmul.f32 %v319, %v319
    %v328 = vmul.f32 %v320, %v320
    %v329 = vmul.f32 %v321, %v321
    %v330 = vsub.f32 %v322, %v326
    %v331 = vsub.f32 %v323, %v327
    %v332 = vsub.f32 %v324, %v328
    %v333 = vsub.f32 %v325, %v329
    %v334 = vmax.f32 %v330, 0.0
    %v335 = vmax.f32 %v331, 0.0
    %v336 = vmax.f32 %v332, 0.0
    %v337 = vmax.f32 %v333, 0.0
    %v338 = vsub.f32 %v283, %v318
    %v339 = vsub.f32 %v284, %v319
    %v340 = vsub.f32 %v285, %v320
    %v341 = vsub.f32 %v286, %v321
    %v342 = vadd.f32 %v334, 1e-05
    %v343 = vadd.f32 %v335, 1e-05
    %v344 = vadd.f32 %v336, 1e-05
    %v345 = vadd.f32 %v337, 1e-05
    %v346 = vrsqrt.pop %v342
    %v347 = vrsqrt.pop %v343
    %v348 = vrsqrt.pop %v344
    %v349 = vrsqrt.pop %v345
    %v350 = vmul.f32 %v338, %v346
    %v351 = vmul.f32 %v339, %v347
    %v352 = vmul.f32 %v340, %v348
    %v353 = vmul.f32 %v341, %v349
    %v355 = vlaneseq
    %v356 = vshrl.u32 %v355, 7
    %v357 = vsub.s32 0, %v356
    %v358 = vrot.slane %v287, %v357
    %v360 = vmul.f32 %v350, %v358
    %v361 = vmul.f32 %v351, %v358
    %v362 = vmul.f32 %v352, %v358
    %v363 = vmul.f32 %v353, %v358
    %v365 = vlaneseq
    %v366 = vshrl.u32 %v365, 7
    %v367 = vsub.s32 0, %v366
    %v368 = vrot.slane %v288, %v367
    %v370 = vadd.f32 %v360, %v368
    %v371 = vadd.f32 %v361, %v368
    %v372 = vadd.f32 %v362, %v368
    %v373 = vadd.f32 %v363, %v368
    %v374 = vld [vmem:[%s7] sm:$0xff]
    %v375 = vld [vmem:[%s7 + $0x8] sm:$0xff]
    %v376 = vld [vmem:[%s7 + $0x10] sm:$0xff]
    %v377 = vld [vmem:[%s7 + $0x18] sm:$0xff]
    %v378 = vld [vmem:[%s8] sm:$0x1]
    %v380 = vlaneseq
    %v381 = vshrl.u32 %v380, 7
    %v382 = vsub.s32 0, %v381
    %v383 = vrot.slane %v378, %v382
    %v386 = vsel %vm289, %v370, 0
    %v389 = vsel %vm289, %v371, 0
    %v392 = vsel %vm289, %v372, 0
    %v395 = vsel %vm289, %v373, 0
    %397 = vmatprep.subr.mxu0 0.0
    %398 = vmatpush1.msra.mxu0 %v374
    %399 = vmatprep.subr.mxu0 0.0
    %400 = vmatpush1.msra.mxu0 %v375
    %401 = vmatprep.subr.mxu0 0.0
    %402 = vmatpush1.msra.mxu0 %v376
    %403 = vmatprep.subr.mxu0 0.0
    %404 = vmatpush1.msra.mxu0 %v377
    %405 = vmatprep.subr.mxu0 0.0
    %406 = vmatpush1.msra.mxu0 0.0
    %407 = vmatprep.subr.mxu0 0.0
    %408 = vmatpush1.msra.mxu0 0.0
    %409 = vmatprep.subr.mxu0 0.0
    %410 = vmatpush1.msra.mxu0 0.0
    %411 = vmatprep.subr.mxu0 0.0
    %412 = vmatpush1.msra.mxu0 0.0
    %413 = vmatprep.subr.mxu0 0.0
    %414 = vmatpush1.msra.mxu0 0.0
    %415 = vmatprep.subr.mxu0 0.0
    %416 = vmatpush1.msra.mxu0 0.0
    %417 = vmatprep.subr.mxu0 0.0
    %418 = vmatpush1.msra.mxu0 0.0
    %419 = vmatprep.subr.mxu0 0.0
    %420 = vmatpush1.msra.mxu0 0.0
    %421 = vmatprep.subr.mxu0 0.0
    %422 = vmatpush1.msra.mxu0 0.0
    %423 = vmatprep.subr.mxu0 0.0
    %424 = vmatpush1.msra.mxu0 0.0
    %425 = vmatprep.subr.mxu0 0.0
    %426 = vmatpush1.msra.mxu0 0.0
    %427 = vmatprep.subr.mxu0 0.0
    %428 = vmatpush1.msra.mxu0 0.0
    %429 = vmatprep.subr.mxu0 0.0
    %430 = vmatpush1.msra.mxu0 0.0
    %431 = vmatprep.subr.mxu0 0.0
    %432 = vmatpush1.msra.mxu0 0.0
    %433 = vmatprep.subr.mxu0 0.0
    %434 = vmatpush1.msra.mxu0 0.0
    %435 = vmatprep.subr.mxu0 0.0
    %436 = vmatpush1.msra.mxu0 0.0
    %437 = vmatprep.subr.mxu0 0.0
    %438 = vmatpush1.msra.mxu0 0.0
    %439 = vmatprep.subr.mxu0 0.0
    %440 = vmatpush1.msra.mxu0 0.0
    %441 = vmatprep.subr.mxu0 0.0
    %442 = vmatpush1.msra.mxu0 0.0
    %443 = vmatprep.subr.mxu0 0.0
    %444 = vmatpush1.msra.mxu0 0.0
    %445 = vmatprep.subr.mxu0 0.0
    %446 = vmatpush1.msra.mxu0 0.0
    %447 = vmatprep.subr.mxu0 0.0
    %448 = vmatpush1.msra.mxu0 0.0
    %449 = vmatprep.subr.mxu0 0.0
    %450 = vmatpush1.msra.mxu0 0.0
    %451 = vmatprep.subr.mxu0 0.0
    %452 = vmatpush1.msra.mxu0 0.0
    %453 = vmatprep.subr.mxu0 0.0
    %454 = vmatpush1.msra.mxu0 0.0
    %455 = vmatprep.subr.mxu0 0.0
    %456 = vmatpush1.msra.mxu0 0.0
    %457 = vmatprep.subr.mxu0 0.0
    %458 = vmatpush1.msra.mxu0 0.0
    %459 = vmatprep.subr.mxu0 0.0
    %460 = vmatpush1.msra.mxu0 0.0
    %461 = vmatprep.mubr.f32.mxu0 0.0
    %462 = vmatmul.mubr.f32.gmra.mrb[0].mxu0 %v386
    %v463 = vpop.f32.mrb[0].mxu0
    %v464 = vadd.f32 %v383, %v463
    %v465 = vpop.f32.mrb[0].mxu0
    %466 = vmatprep.mubr.f32.mxu0 0.0
    %467 = vmatmul.mubr.f32.gmra.mrb[0].mxu0 %v389
    %v468 = vpop.f32.mrb[0].mxu0
    %v469 = vadd.f32 %v383, %v468
    %v470 = vpop.f32.mrb[0].mxu0
    %471 = vmatprep.mubr.f32.mxu0 0.0
    %472 = vmatmul.mubr.f32.gmra.mrb[0].mxu0 %v392
    %v473 = vpop.f32.mrb[0].mxu0
    %v474 = vadd.f32 %v383, %v473
    %v475 = vpop.f32.mrb[0].mxu0
    %476 = vmatprep.mubr.f32.mxu0 0.0
    %477 = vmatmul.mubr.f32.gmra.mrb[0].mxu0 %v395
    %v478 = vpop.f32.mrb[0].mxu0
    %v479 = vadd.f32 %v383, %v478
    %v480 = vpop.f32.mrb[0].mxu0
    %481 = vdwg.mxu0
    %v482 = vmax.f32 %v464, 0.0
    %v483 = vmax.f32 %v469, 0.0
    %v484 = vmax.f32 %v474, 0.0
    %v485 = vmax.f32 %v479, 0.0
    %v486 = vld [vmem:[%s9] sm:$0x1]
    %v487 = vld [vmem:[%s10] sm:$0x1]
    %v488 = vsel %vm289, %v482, 0.0
    %489 = vadd.xlane.f32.xlu0 %v488
    %v490 = vpop.xlane.xlu0 %489
    %v491 = vsel %vm289, %v483, 0.0
    %492 = vadd.xlane.f32.xlu0 %v491
    %v493 = vpop.xlane.xlu0 %492
    %v494 = vsel %vm289, %v484, 0.0
    %495 = vadd.xlane.f32.xlu0 %v494
    %v496 = vpop.xlane.xlu0 %495
    %v497 = vsel %vm289, %v485, 0.0
    %498 = vadd.xlane.f32.xlu0 %v497
    %v499 = vpop.xlane.xlu0 %498
    %v500 = vmul.f32 %v482, %v482
    %v501 = vmul.f32 %v483, %v483
    %v502 = vmul.f32 %v484, %v484
    %v503 = vmul.f32 %v485, %v485
    %v504 = vsel %vm289, %v500, 0.0
    %505 = vadd.xlane.f32.xlu0 %v504
    %v506 = vpop.xlane.xlu0 %505
    %v507 = vsel %vm289, %v501, 0.0
    %508 = vadd.xlane.f32.xlu0 %v507
    %v509 = vpop.xlane.xlu0 %508
    %v510 = vsel %vm289, %v502, 0.0
    %511 = vadd.xlane.f32.xlu0 %v510
    %v512 = vpop.xlane.xlu0 %511
    %v513 = vsel %vm289, %v503, 0.0
    %514 = vadd.xlane.f32.xlu0 %v513
    %v515 = vpop.xlane.xlu0 %514
    %v516 = vmul.f32 %v490, 0.03125
    %v517 = vmul.f32 %v493, 0.03125
    %v518 = vmul.f32 %v496, 0.03125
    %v519 = vmul.f32 %v499, 0.03125
    %v520 = vmul.f32 %v506, 0.03125
    %v521 = vmul.f32 %v509, 0.03125
    %v522 = vmul.f32 %v512, 0.03125
    %v523 = vmul.f32 %v515, 0.03125
    %v524 = vmul.f32 %v516, %v516
    %v525 = vmul.f32 %v517, %v517
    %v526 = vmul.f32 %v518, %v518
    %v527 = vmul.f32 %v519, %v519
    %v528 = vsub.f32 %v520, %v524
    %v529 = vsub.f32 %v521, %v525
    %v530 = vsub.f32 %v522, %v526
    %v531 = vsub.f32 %v523, %v527
    %v532 = vmax.f32 %v528, 0.0
    %v533 = vmax.f32 %v529, 0.0
    %v534 = vmax.f32 %v530, 0.0
    %v535 = vmax.f32 %v531, 0.0
    %v536 = vsub.f32 %v482, %v516
    %v537 = vsub.f32 %v483, %v517
    %v538 = vsub.f32 %v484, %v518
    %v539 = vsub.f32 %v485, %v519
    %v540 = vadd.f32 %v532, 1e-05
    %v541 = vadd.f32 %v533, 1e-05
    %v542 = vadd.f32 %v534, 1e-05
    %v543 = vadd.f32 %v535, 1e-05
    %v544 = vrsqrt.pop %v540
    %v545 = vrsqrt.pop %v541
    %v546 = vrsqrt.pop %v542
    %v547 = vrsqrt.pop %v543
    %v548 = vmul.f32 %v536, %v544
    %v549 = vmul.f32 %v537, %v545
    %v550 = vmul.f32 %v538, %v546
    %v551 = vmul.f32 %v539, %v547
    %v553 = vlaneseq
    %v554 = vshrl.u32 %v553, 7
    %v555 = vsub.s32 0, %v554
    %v556 = vrot.slane %v486, %v555
    %v558 = vmul.f32 %v548, %v556
    %v559 = vmul.f32 %v549, %v556
    %v560 = vmul.f32 %v550, %v556
    %v561 = vmul.f32 %v551, %v556
    %v563 = vlaneseq
    %v564 = vshrl.u32 %v563, 7
    %v565 = vsub.s32 0, %v564
    %v566 = vrot.slane %v487, %v565
    %v568 = vadd.f32 %v558, %v566
    %v569 = vadd.f32 %v559, %v566
    %v570 = vadd.f32 %v560, %v566
    %v571 = vadd.f32 %v561, %v566
    %v572 = vld [vmem:[%s11] sm:$0xff]
    %v573 = vld [vmem:[%s11 + $0x8] sm:$0xff]
    %v574 = vld [vmem:[%s11 + $0x10] sm:$0xff]
    %v575 = vld [vmem:[%s11 + $0x18] sm:$0xff]
    %v576 = vld [vmem:[%s12] sm:$0x1]
    %v578 = vlaneseq
    %v579 = vshrl.u32 %v578, 7
    %v580 = vsub.s32 0, %v579
    %v581 = vrot.slane %v576, %v580
    %v584 = vsel %vm289, %v568, 0
    %v587 = vsel %vm289, %v569, 0
    %v590 = vsel %vm289, %v570, 0
    %v593 = vsel %vm289, %v571, 0
    %595 = vmatprep.subr.mxu0 0.0
    %596 = vmatpush1.msra.mxu0 %v572
    %597 = vmatprep.subr.mxu0 0.0
    %598 = vmatpush1.msra.mxu0 %v573
    %599 = vmatprep.subr.mxu0 0.0
    %600 = vmatpush1.msra.mxu0 %v574
    %601 = vmatprep.subr.mxu0 0.0
    %602 = vmatpush1.msra.mxu0 %v575
    %603 = vmatprep.subr.mxu0 0.0
    %604 = vmatpush1.msra.mxu0 0.0
    %605 = vmatprep.subr.mxu0 0.0
    %606 = vmatpush1.msra.mxu0 0.0
    %607 = vmatprep.subr.mxu0 0.0
    %608 = vmatpush1.msra.mxu0 0.0
    %609 = vmatprep.subr.mxu0 0.0
    %610 = vmatpush1.msra.mxu0 0.0
    %611 = vmatprep.subr.mxu0 0.0
    %612 = vmatpush1.msra.mxu0 0.0
    %613 = vmatprep.subr.mxu0 0.0
    %614 = vmatpush1.msra.mxu0 0.0
    %615 = vmatprep.subr.mxu0 0.0
    %616 = vmatpush1.msra.mxu0 0.0
    %617 = vmatprep.subr.mxu0 0.0
    %618 = vmatpush1.msra.mxu0 0.0
    %619 = vmatprep.subr.mxu0 0.0
    %620 = vmatpush1.msra.mxu0 0.0
    %621 = vmatprep.subr.mxu0 0.0
    %622 = vmatpush1.msra.mxu0 0.0
    %623 = vmatprep.subr.mxu0 0.0
    %624 = vmatpush1.msra.mxu0 0.0
    %625 = vmatprep.subr.mxu0 0.0
    %626 = vmatpush1.msra.mxu0 0.0
    %627 = vmatprep.subr.mxu0 0.0
    %628 = vmatpush1.msra.mxu0 0.0
    %629 = vmatprep.subr.mxu0 0.0
    %630 = vmatpush1.msra.mxu0 0.0
    %631 = vmatprep.subr.mxu0 0.0
    %632 = vmatpush1.msra.mxu0 0.0
    %633 = vmatprep.subr.mxu0 0.0
    %634 = vmatpush1.msra.mxu0 0.0
    %635 = vmatprep.subr.mxu0 0.0
    %636 = vmatpush1.msra.mxu0 0.0
    %637 = vmatprep.subr.mxu0 0.0
    %638 = vmatpush1.msra.mxu0 0.0
    %639 = vmatprep.subr.mxu0 0.0
    %640 = vmatpush1.msra.mxu0 0.0
    %641 = vmatprep.subr.mxu0 0.0
    %642 = vmatpush1.msra.mxu0 0.0
    %643 = vmatprep.subr.mxu0 0.0
    %644 = vmatpush1.msra.mxu0 0.0
    %645 = vmatprep.subr.mxu0 0.0
    %646 = vmatpush1.msra.mxu0 0.0
    %647 = vmatprep.subr.mxu0 0.0
    %648 = vmatpush1.msra.mxu0 0.0
    %649 = vmatprep.subr.mxu0 0.0
    %650 = vmatpush1.msra.mxu0 0.0
    %651 = vmatprep.subr.mxu0 0.0
    %652 = vmatpush1.msra.mxu0 0.0
    %653 = vmatprep.subr.mxu0 0.0
    %654 = vmatpush1.msra.mxu0 0.0
    %655 = vmatprep.subr.mxu0 0.0
    %656 = vmatpush1.msra.mxu0 0.0
    %657 = vmatprep.subr.mxu0 0.0
    %658 = vmatpush1.msra.mxu0 0.0
    %659 = vmatprep.mubr.f32.mxu0 0.0
    %660 = vmatmul.mubr.f32.gmra.mrb[0].mxu0 %v584
    %v661 = vpop.f32.mrb[0].mxu0
    %v662 = vadd.f32 %v581, %v661
    %v663 = vpop.f32.mrb[0].mxu0
    %664 = vmatprep.mubr.f32.mxu0 0.0
    %665 = vmatmul.mubr.f32.gmra.mrb[0].mxu0 %v587
    %v666 = vpop.f32.mrb[0].mxu0
    %v667 = vadd.f32 %v581, %v666
    %v668 = vpop.f32.mrb[0].mxu0
    %669 = vmatprep.mubr.f32.mxu0 0.0
    %670 = vmatmul.mubr.f32.gmra.mrb[0].mxu0 %v590
    %v671 = vpop.f32.mrb[0].mxu0
    %v672 = vadd.f32 %v581, %v671
    %v673 = vpop.f32.mrb[0].mxu0
    %674 = vmatprep.mubr.f32.mxu0 0.0
    %675 = vmatmul.mubr.f32.gmra.mrb[0].mxu0 %v593
    %v676 = vpop.f32.mrb[0].mxu0
    %v677 = vadd.f32 %v581, %v676
    %v678 = vpop.f32.mrb[0].mxu0
    %679 = vdwg.mxu0
    %vm680 = vcmask 785408
    %681 = vst.msk [vmem:[#allocation8] sm:$0xff] %vm680, %v662
    %682 = vst.msk [vmem:[#allocation8 + $0x8] sm:$0xff] %vm680, %v667
    %683 = vst.msk [vmem:[#allocation8 + $0x10] sm:$0xff] %vm680, %v672
    %684 = vst.msk [vmem:[#allocation8 + $0x18] sm:$0xff] %vm680, %v677
    // Predicated region
    $region66: #{tpu_custom_call.1} parent=1 // pred_check
      _
    $region67: #{tpu_custom_call.1} parent=1 // pred_check_branch
      %686 = sbr.rel (0) target = $region69
    $region68: #{tpu_custom_call.1} parent=1 // pred_region
      %s688 = ssub.s32 512, 512
      %689 = vsyncadd [#allocation4], %s688
      %s690 = sshll.u32 [#allocation8], 4
      %s691 = int_to_ptr.vmem [resolvable:$true] %s690
      %696 = dma.vmem_to_hbm [thread:$0]  %s691, 512, %s13, [#allocation4], 128, 128, 8
    $region69: #{tpu_custom_call.1} parent=1 // pred_fallthru
      _
    // Predicated region
    $region70: #{tpu_custom_call.1} parent=1 // pred_check
      _
    $region71: #{tpu_custom_call.1} parent=1 // pred_check_branch
      %698 = sbr.rel (0) target = $region73
    $region72: #{tpu_custom_call.1} parent=1 // pred_region
      %699 = dma.done [#allocation4], 512
    $region73: #{tpu_custom_call.1} parent=1 // pred_fallthru
      _
    %700 = vsyncpa [#allocation3], 1
    %701 = vsyncpa [#allocation6], 1
    %702 = vsyncpa [#allocation4], 1

</llo_original>
